<compile_context>
chip_gen: v5e
topology: v5e:2x2
jax: 0.10.0
libtpu: 0.0.40
codegen_flags: <defaults>
</compile_context>

<pallas_src>
import jax
import jax.numpy as jnp
from jax.experimental import pallas as pl
from jax.experimental.pallas import tpu as pltpu

H1 = 200    # PyTorch hidden width of l1 / l4
H2 = 300    # PyTorch hidden width of l2 / l5
H1P = 256   # padded to a 128-lane multiple
H2P = 384   # padded to a 128-lane multiple


def _round_up(n, m):
    return ((n + m - 1) // m) * m


def critic_kernel(xu_ref,
                  w14_ref, b14_ref,
                  w2_ref, b2_ref,
                  w5_ref, b5_ref,
                  w36_ref, b36_ref,
                  q_ref):
    # Layer 1, both heads fused into one [K, 2*H1P] bf16 weight -> single K=16
    # MXU push.  bf16 operands, f32 accumulation; bias/ReLU in f32.
    xu = xu_ref[...].astype(jnp.bfloat16)
    hg = jnp.dot(xu, w14_ref[...], preferred_element_type=jnp.float32) + b14_ref[...]
    hg = jnp.maximum(hg, 0.0).astype(jnp.bfloat16)

    # Lane-aligned split at 256 (a 128-lane tile boundary).
    h = hg[:, :H1P]      # head-1 (l1 output, zero-padded cols 200..255)
    g = hg[:, H1P:]      # head-2 (l4 output, zero-padded cols 200..255)

    # Layer 2 per head on fully padded (256 -> 384) tiles, bf16 in / f32 out.
    h2 = jnp.maximum(
        jnp.dot(h, w2_ref[...], preferred_element_type=jnp.float32) + b2_ref[...], 0.0)
    g2 = jnp.maximum(
        jnp.dot(g, w5_ref[...], preferred_element_type=jnp.float32) + b5_ref[...], 0.0)

    # Layer 3 on the VPU/XLU instead of two N=2 MXU passes: broadcast-multiply
    # by the [1, H2P] weight rows and reduce across lanes.  Padded lanes
    # (300..383) hold zero weights, so they contribute nothing.
    w3r = w36_ref[0:1, :].astype(jnp.float32)
    w6r = w36_ref[1:2, :].astype(jnp.float32)
    q1 = jnp.sum(h2 * w3r, axis=-1, keepdims=True)
    q2 = jnp.sum(g2 * w6r, axis=-1, keepdims=True)
    q_ref[...] = jnp.concatenate([q1, q2], axis=-1) + b36_ref[...]


def critic_forward(x, u, fused_params, *, batch_tile=512):
    """x: [B, state_dim], u: [B, action_dim]. Returns (q1, q2), each [B, 1]."""
    B, sd = x.shape
    ad = u.shape[1]
    in_dim = sd + ad
    w14, b14, w2p, b2p, w5p, b5p, w36, b36 = fused_params
    kp = w14.shape[0]                       # layer-1 K, padded to a multiple of 8

    # Batch tile: multiple of 128 (sane for any user-supplied batch_tile, full
    # MXU M-passes on v5e), capped at batch_tile.  When B > batch_tile, cap the
    # tile so the batch grid has >= 2 steps -> both v7x TensorCores are used on
    # the "parallel" axis, and the steps are balanced.
    bt = max(128, _round_up(int(batch_tile), 128))
    if B <= bt:
        tb = _round_up(B, 8)                # single grid step
    else:
        tb = min(bt, _round_up(pl.cdiv(B, 2), 128))
    Bp = _round_up(B, tb)
    grid = (Bp // tb,)

    # Pack [x | u] into one lane-contiguous K=kp operand: one layer-1 dot, one
    # input DMA stream.  Padded batch rows / K columns are zeros (absorbed by
    # zero weight rows; padded rows sliced off below).
    xu = jnp.concatenate([x, u], axis=1)
    xu = jnp.pad(xu, ((0, Bp - B), (0, kp - in_dim)))

    def batch_spec(cols):
        return pl.BlockSpec((tb, cols), lambda i: (i, 0))

    def full_spec(arr):
        # Whole-array block, constant index_map -> DMA'd once, not re-fetched
        # per grid step.
        return pl.BlockSpec(arr.shape, lambda i: (0, 0))

    # Cost model from the true (unpadded) widths.
    flops = 4 * Bp * (in_dim * H1 + H1 * H2 + H2)
    w_bytes = sum(int(a.size) * a.dtype.itemsize for a in fused_params)
    bytes_accessed = (w_bytes
                      + int(xu.size) * xu.dtype.itemsize
                      + Bp * 2 * 4)

    q = pl.pallas_call(
        critic_kernel,
        out_shape=jax.ShapeDtypeStruct((Bp, 2), jnp.float32),
        grid_spec=pltpu.PrefetchScalarGridSpec(
            num_scalar_prefetch=0,
            grid=grid,
            in_specs=[batch_spec(kp),
                      full_spec(w14), full_spec(b14),
                      full_spec(w2p), full_spec(b2p),
                      full_spec(w5p), full_spec(b5p),
                      full_spec(w36), full_spec(b36)],
            out_specs=pl.BlockSpec((tb, 2), lambda i: (i, 0)),
        ),
        compiler_params=pltpu.CompilerParams(
            dimension_semantics=("parallel",),
            vmem_limit_bytes=32 << 20),     # explicit: v5e scoped default is 16 MiB
        cost_estimate=pl.CostEstimate(flops=flops, transcendentals=0,
                                      bytes_accessed=bytes_accessed),
    )(xu, *fused_params)

    q = q[:B]
    return q[:, 0:1], q[:, 1:2]


def init_params(key, state_dim, action_dim):
    """Raw (PyTorch-like) params. Weights [in, out], biases [1, out], f32."""
    in_dim = state_dim + action_dim
    dims = [(in_dim, H1), (H1, H2), (H2, 1),   # l1, l2, l3
            (in_dim, H1), (H1, H2), (H2, 1)]   # l4, l5, l6
    params = []
    for i, (fan_in, fan_out) in enumerate(dims):
        kw, kb = jax.random.split(jax.random.fold_in(key, i))
        bound = 1.0 / jnp.sqrt(fan_in)
        w = jax.random.uniform(kw, (fan_in, fan_out), jnp.float32, -bound, bound)
        b = jax.random.uniform(kb, (1, fan_out), jnp.float32, -bound, bound)
        params += [w, b]
    return tuple(params)


def fuse_params(raw_params):
    """Pack/pad raw f32 params into the fused kernel layout (bf16 weights)."""
    w1, b1, w2, b2, w3, b3, w4, b4, w5, b5, w6, b6 = raw_params
    in_dim = w1.shape[0]
    kp = _round_up(in_dim, 8)

    def pad2(a, rows, cols):
        return jnp.pad(a, ((0, rows - a.shape[0]), (0, cols - a.shape[1])))

    # Layer 1: fused [kp, 2*H1P]; head-1 cols [0:H1P], head-2 cols [H1P:].
    w14 = jnp.concatenate([pad2(w1, kp, H1P), pad2(w4, kp, H1P)],
                          axis=1).astype(jnp.bfloat16)
    b14 = jnp.concatenate([pad2(b1, 1, H1P), pad2(b4, 1, H1P)], axis=1)  # f32

    # Layer 2: padded per-head weights.
    w2p = pad2(w2, H1P, H2P).astype(jnp.bfloat16)
    w5p = pad2(w5, H1P, H2P).astype(jnp.bfloat16)
    b2p = pad2(b2, 1, H2P)
    b5p = pad2(b5, 1, H2P)

    # Layer 3: single lane-dense [2, H2P] tile; row 0 = w3^T, row 1 = w6^T.
    w36 = jnp.concatenate([pad2(w3.T, 1, H2P), pad2(w6.T, 1, H2P)],
                          axis=0).astype(jnp.bfloat16)
    b36 = jnp.concatenate([b3, b6], axis=1)                              # (1, 2) f32

    return (w14, b14, w2p, b2p, w5p, b5p, w36, b36)


def critic_reference(x, u, raw_params):
    """Pure-JAX f32 reference of the PyTorch forward()."""
    w1, b1, w2, b2, w3, b3, w4, b4, w5, b5, w6, b6 = raw_params
    xu = jnp.concatenate([x, u], axis=1)
    h1 = jax.nn.relu(xu @ w1 + b1)
    h1 = jax.nn.relu(h1 @ w2 + b2)
    q1 = h1 @ w3 + b3
    h2 = jax.nn.relu(xu @ w4 + b4)
    h2 = jax.nn.relu(h2 @ w5 + b5)
    q2 = h2 @ w6 + b6
    return q1, q2


if __name__ == "__main__":
    state_dim, action_dim, batch = 8, 4, 2

    key = jax.random.PRNGKey(0)
    kx, ku, kp_ = jax.random.split(key, 3)
    x = jax.random.normal(kx, (batch, state_dim), jnp.float32)
    u = jax.random.normal(ku, (batch, action_dim), jnp.float32)
    raw_params = init_params(kp_, state_dim, action_dim)
    fused = fuse_params(raw_params)

    # bf16 weights/operands (f32 accumulation) -> tolerance loosened vs. pure f32.
    ATOL = RTOL = 2e-2

    # Small-batch path (grid = (1,)).
    q1, q2 = critic_forward(x, u, fused)
    q1 = jax.block_until_ready(q1)
    q2 = jax.block_until_ready(q2)

    r1, r2 = critic_reference(x, u, raw_params)
    assert q1.shape == (batch, 1) and q2.shape == (batch, 1)
    assert jnp.allclose(q1, r1, atol=ATOL, rtol=RTOL)
    assert jnp.allclose(q2, r2, atol=ATOL, rtol=RTOL)

    # Larger, non-tile-divisible batch exercising the multi-step batch grid.
    B2 = 300
    kx2, ku2 = jax.random.split(jax.random.fold_in(key, 123))
    x2 = jax.random.normal(kx2, (B2, state_dim), jnp.float32)
    u2 = jax.random.normal(ku2, (B2, action_dim), jnp.float32)
    p1, p2 = critic_forward(x2, u2, fused, batch_tile=128)
    p1 = jax.block_until_ready(p1)
    p2 = jax.block_until_ready(p2)
    s1, s2 = critic_reference(x2, u2, raw_params)
    assert p1.shape == (B2, 1) and p2.shape == (B2, 1)
    assert jnp.allclose(p1, s1, atol=ATOL, rtol=RTOL)
    assert jnp.allclose(p2, s2, atol=ATOL, rtol=RTOL)

    print("KERNEL_OK")
</pallas_src>

<mosaic_0001>
module attributes {stable_mosaic.version = 11 : i64} {
  func.func @critic_kernel(%arg0: i32, %arg1: memref<8x16xf32, #tpu.memory_space<vmem>>, %arg2: memref<16x512xbf16, #tpu.memory_space<vmem>>, %arg3: memref<1x512xf32, #tpu.memory_space<vmem>>, %arg4: memref<256x384xbf16, #tpu.memory_space<vmem>>, %arg5: memref<1x384xf32, #tpu.memory_space<vmem>>, %arg6: memref<256x384xbf16, #tpu.memory_space<vmem>>, %arg7: memref<1x384xf32, #tpu.memory_space<vmem>>, %arg8: memref<2x384xbf16, #tpu.memory_space<vmem>>, %arg9: memref<1x2xf32, #tpu.memory_space<vmem>>, %arg10: memref<8x2xf32, #tpu.memory_space<vmem>>) attributes {dimension_semantics = [#tpu.dimension_semantics<parallel>], iteration_bounds = array<i64: 1>, scalar_prefetch = 0 : i64, scratch_operands = 0 : i64, tpu.core_type = #tpu.core_type<tc>, window_params = [{transform_indices = @transform_0, window_bounds = array<i64: 8, 16>}, {pipeline_mode = #tpu.pipeline_mode<synchronous>, transform_indices = @transform_1, window_bounds = array<i64: 16, 512>}, {pipeline_mode = #tpu.pipeline_mode<synchronous>, transform_indices = @transform_2, window_bounds = array<i64: 1, 512>}, {pipeline_mode = #tpu.pipeline_mode<synchronous>, transform_indices = @transform_3, window_bounds = array<i64: 256, 384>}, {pipeline_mode = #tpu.pipeline_mode<synchronous>, transform_indices = @transform_4, window_bounds = array<i64: 1, 384>}, {pipeline_mode = #tpu.pipeline_mode<synchronous>, transform_indices = @transform_5, window_bounds = array<i64: 256, 384>}, {pipeline_mode = #tpu.pipeline_mode<synchronous>, transform_indices = @transform_6, window_bounds = array<i64: 1, 384>}, {pipeline_mode = #tpu.pipeline_mode<synchronous>, transform_indices = @transform_7, window_bounds = array<i64: 2, 384>}, {pipeline_mode = #tpu.pipeline_mode<synchronous>, transform_indices = @transform_8, window_bounds = array<i64: 1, 2>}, {transform_indices = @transform_9, window_bounds = array<i64: 8, 2>}]} {
    %c0 = arith.constant 0 : index
    %c0_0 = arith.constant 0 : index
    %0 = vector.load %arg1[%c0, %c0_0] : memref<8x16xf32, #tpu.memory_space<vmem>>, vector<8x16xf32>
    %1 = arith.truncf %0 : vector<8x16xf32> to vector<8x16xbf16>
    %c0_1 = arith.constant 0 : index
    %c0_2 = arith.constant 0 : index
    %2 = vector.load %arg2[%c0_1, %c0_2] : memref<16x512xbf16, #tpu.memory_space<vmem>>, vector<16x512xbf16>
    %cst = arith.constant dense<0.000000e+00> : vector<8x512xf32>
    %3 = tpu.matmul %1, %2, %cst {dimension_numbers = #tpu.dot_dimension_numbers<[1], [0], [0], [1], [0, 0, 1, 1], [], []>} : vector<8x16xbf16>, vector<16x512xbf16>, vector<8x512xf32> -> vector<8x512xf32>
    %c0_3 = arith.constant 0 : index
    %c0_4 = arith.constant 0 : index
    %4 = vector.load %arg3[%c0_3, %c0_4] : memref<1x512xf32, #tpu.memory_space<vmem>>, vector<1x512xf32>
    %5 = vector.broadcast %4 : vector<1x512xf32> to vector<8x512xf32>
    %6 = arith.addf %3, %5 : vector<8x512xf32>
    %cst_5 = arith.constant 0.000000e+00 : f32
    %7 = vector.broadcast %cst_5 : f32 to vector<8x512xf32>
    %8 = arith.maximumf %6, %7 : vector<8x512xf32>
    %9 = arith.truncf %8 : vector<8x512xf32> to vector<8x512xbf16>
    %10 = vector.extract_strided_slice %9 {offsets = [0, 0], sizes = [8, 256], strides = [1, 1]} : vector<8x512xbf16> to vector<8x256xbf16>
    %11 = vector.extract_strided_slice %9 {offsets = [0, 256], sizes = [8, 256], strides = [1, 1]} : vector<8x512xbf16> to vector<8x256xbf16>
    %c0_6 = arith.constant 0 : index
    %c0_7 = arith.constant 0 : index
    %12 = vector.load %arg4[%c0_6, %c0_7] : memref<256x384xbf16, #tpu.memory_space<vmem>>, vector<256x384xbf16>
    %cst_8 = arith.constant dense<0.000000e+00> : vector<8x384xf32>
    %13 = tpu.matmul %10, %12, %cst_8 {dimension_numbers = #tpu.dot_dimension_numbers<[1], [0], [0], [1], [0, 0, 1, 1], [], []>} : vector<8x256xbf16>, vector<256x384xbf16>, vector<8x384xf32> -> vector<8x384xf32>
    %c0_9 = arith.constant 0 : index
    %c0_10 = arith.constant 0 : index
    %14 = vector.load %arg5[%c0_9, %c0_10] : memref<1x384xf32, #tpu.memory_space<vmem>>, vector<1x384xf32>
    %15 = vector.broadcast %14 : vector<1x384xf32> to vector<8x384xf32>
    %16 = arith.addf %13, %15 : vector<8x384xf32>
    %cst_11 = arith.constant 0.000000e+00 : f32
    %17 = vector.broadcast %cst_11 : f32 to vector<8x384xf32>
    %18 = arith.maximumf %16, %17 : vector<8x384xf32>
    %c0_12 = arith.constant 0 : index
    %c0_13 = arith.constant 0 : index
    %19 = vector.load %arg6[%c0_12, %c0_13] : memref<256x384xbf16, #tpu.memory_space<vmem>>, vector<256x384xbf16>
    %cst_14 = arith.constant dense<0.000000e+00> : vector<8x384xf32>
    %20 = tpu.matmul %11, %19, %cst_14 {dimension_numbers = #tpu.dot_dimension_numbers<[1], [0], [0], [1], [0, 0, 1, 1], [], []>} : vector<8x256xbf16>, vector<256x384xbf16>, vector<8x384xf32> -> vector<8x384xf32>
    %c0_15 = arith.constant 0 : index
    %c0_16 = arith.constant 0 : index
    %21 = vector.load %arg7[%c0_15, %c0_16] : memref<1x384xf32, #tpu.memory_space<vmem>>, vector<1x384xf32>
    %22 = vector.broadcast %21 : vector<1x384xf32> to vector<8x384xf32>
    %23 = arith.addf %20, %22 : vector<8x384xf32>
    %cst_17 = arith.constant 0.000000e+00 : f32
    %24 = vector.broadcast %cst_17 : f32 to vector<8x384xf32>
    %25 = arith.maximumf %23, %24 : vector<8x384xf32>
    %c0_18 = arith.constant 0 : index
    %c0_19 = arith.constant 0 : index
    %26 = vector.load %arg8[%c0_18, %c0_19] : memref<2x384xbf16, #tpu.memory_space<vmem>>, vector<1x384xbf16>
    %27 = arith.extf %26 : vector<1x384xbf16> to vector<1x384xf32>
    %c1 = arith.constant 1 : index
    %c0_20 = arith.constant 0 : index
    %28 = vector.load %arg8[%c1, %c0_20] : memref<2x384xbf16, #tpu.memory_space<vmem>>, vector<1x384xbf16>
    %29 = arith.extf %28 : vector<1x384xbf16> to vector<1x384xf32>
    %30 = vector.broadcast %27 : vector<1x384xf32> to vector<8x384xf32>
    %31 = arith.mulf %18, %30 : vector<8x384xf32>
    %cst_21 = arith.constant dense<0.000000e+00> : vector<8xf32>
    %32 = vector.multi_reduction <add>, %31, %cst_21 [1] : vector<8x384xf32> to vector<8xf32>
    %33 = vector.shape_cast %32 : vector<8xf32> to vector<8x1xf32>
    %34 = vector.broadcast %29 : vector<1x384xf32> to vector<8x384xf32>
    %35 = arith.mulf %25, %34 : vector<8x384xf32>
    %cst_22 = arith.constant dense<0.000000e+00> : vector<8xf32>
    %36 = vector.multi_reduction <add>, %35, %cst_22 [1] : vector<8x384xf32> to vector<8xf32>
    %37 = vector.shape_cast %36 : vector<8xf32> to vector<8x1xf32>
    %38 = tpu.concatenate %33, %37 in 1 : vector<8x1xf32>, vector<8x1xf32> -> vector<8x2xf32>
    %c0_23 = arith.constant 0 : index
    %c0_24 = arith.constant 0 : index
    %39 = vector.load %arg9[%c0_23, %c0_24] : memref<1x2xf32, #tpu.memory_space<vmem>>, vector<1x2xf32>
    %40 = vector.broadcast %39 : vector<1x2xf32> to vector<8x2xf32>
    %41 = arith.addf %38, %40 : vector<8x2xf32>
    %c0_25 = arith.constant 0 : index
    %c0_26 = arith.constant 0 : index
    %42 = vector.load %arg10[%c0_25, %c0_26] : memref<8x2xf32, #tpu.memory_space<vmem>>, vector<8x2xf32>
    tpu.vector_store %arg10[%c0_25, %c0_26], %41 {strides = array<i32>} : memref<8x2xf32, #tpu.memory_space<vmem>>, vector<8x2xf32>,
    return
  }
  func.func @transform_0(%arg0: i32) -> (i32, i32) {
    %c0_i32 = arith.constant 0 : i32
    %c0_i32_0 = arith.constant 0 : i32
    return %arg0, %c0_i32 : i32, i32
  }
  func.func @transform_1(%arg0: i32) -> (i32, i32) {
    %c0_i32 = arith.constant 0 : i32
    %c0_i32_0 = arith.constant 0 : i32
    %c0_i32_1 = arith.constant 0 : i32
    return %c0_i32, %c0_i32_0 : i32, i32
  }
  func.func @transform_2(%arg0: i32) -> (i32, i32) {
    %c0_i32 = arith.constant 0 : i32
    %c0_i32_0 = arith.constant 0 : i32
    %c0_i32_1 = arith.constant 0 : i32
    return %c0_i32, %c0_i32_0 : i32, i32
  }
  func.func @transform_3(%arg0: i32) -> (i32, i32) {
    %c0_i32 = arith.constant 0 : i32
    %c0_i32_0 = arith.constant 0 : i32
    %c0_i32_1 = arith.constant 0 : i32
    return %c0_i32, %c0_i32_0 : i32, i32
  }
  func.func @transform_4(%arg0: i32) -> (i32, i32) {
    %c0_i32 = arith.constant 0 : i32
    %c0_i32_0 = arith.constant 0 : i32
    %c0_i32_1 = arith.constant 0 : i32
    return %c0_i32, %c0_i32_0 : i32, i32
  }
  func.func @transform_5(%arg0: i32) -> (i32, i32) {
    %c0_i32 = arith.constant 0 : i32
    %c0_i32_0 = arith.constant 0 : i32
    %c0_i32_1 = arith.constant 0 : i32
    return %c0_i32, %c0_i32_0 : i32, i32
  }
  func.func @transform_6(%arg0: i32) -> (i32, i32) {
    %c0_i32 = arith.constant 0 : i32
    %c0_i32_0 = arith.constant 0 : i32
    %c0_i32_1 = arith.constant 0 : i32
    return %c0_i32, %c0_i32_0 : i32, i32
  }
  func.func @transform_7(%arg0: i32) -> (i32, i32) {
    %c0_i32 = arith.constant 0 : i32
    %c0_i32_0 = arith.constant 0 : i32
    %c0_i32_1 = arith.constant 0 : i32
    return %c0_i32, %c0_i32_0 : i32, i32
  }
  func.func @transform_8(%arg0: i32) -> (i32, i32) {
    %c0_i32 = arith.constant 0 : i32
    %c0_i32_0 = arith.constant 0 : i32
    %c0_i32_1 = arith.constant 0 : i32
    return %c0_i32, %c0_i32_0 : i32, i32
  }
  func.func @transform_9(%arg0: i32) -> (i32, i32) {
    %c0_i32 = arith.constant 0 : i32
    %c0_i32_0 = arith.constant 0 : i32
    return %arg0, %c0_i32 : i32, i32
  }
}

</mosaic_0001>

<llo_original>
// kernel: tpu_custom_call.1
$region0: #{tpu_custom_call.1}
  #allocation0 [shape = 'u32[]', space=smem, size = 0x4, offset = 0x4, fixed_abs, tag = 'smem constant byte address 0x4 - core index']
  #allocation1 [shape = 'u32[72,128]{1,0:T(1,128)}', space=vmem, size = 0x9000, scoped, tag = 'internal scratch']
  %s0 = inlined_call_operand.hbm [shape: f32[8,16], index: 0, kind: input, shape index: {}]
  %s1 = inlined_call_operand.hbm [shape: bf16[16,512], index: 1, kind: input, shape index: {}]
  %s2 = inlined_call_operand.hbm [shape: f32[1,512], index: 2, kind: input, shape index: {}]
  %s3 = inlined_call_operand.hbm [shape: bf16[256,384], index: 3, kind: input, shape index: {}]
  %s4 = inlined_call_operand.vmem [shape: f32[1,384], index: 4, kind: input, shape index: {}]
  %s5 = inlined_call_operand.hbm [shape: bf16[256,384], index: 5, kind: input, shape index: {}]
  %s6 = inlined_call_operand.hbm [shape: f32[1,384], index: 6, kind: input, shape index: {}]
  %s7 = inlined_call_operand.vmem [shape: bf16[2,384], index: 7, kind: input, shape index: {}]
  %s8 = inlined_call_operand.vmem [shape: f32[1,2], index: 8, kind: input, shape index: {}]
  %s9 = inlined_call_operand.vmem [shape: f32[8,2], index: 9, kind: output, shape index: {}]
  %s10 = sld [smem:[#allocation0]]
  $region70: #{tpu_custom_call.1} parent=0
    _
  %s12 = ssub.s32 1, %s10
  %s13 = scalar_select 0, %s12, %s10
  $region1: #{tpu_custom_call.1} parent=0
    #allocation2 [shape = 'u8[4096]{0}', space=vmem, size = 0x1000, scoped, tag = 'input window, operand 0, single buffered']
    #allocation3 [shape = 's32[1]{0}', space=sflag, size = 0x4, scoped, tag = 'scoped memory for tpu_custom_call.1']
    #allocation4 [shape = 'u8[16384]{0}', space=vmem, size = 0x4000, scoped, tag = 'input window, operand 1, single buffered']
    #allocation5 [shape = 's32[1]{0}', space=sflag, size = 0x4, scoped, tag = 'scoped memory for tpu_custom_call.1']
    #allocation6 [shape = 'u8[2048]{0}', space=vmem, size = 0x800, scoped, tag = 'input window, operand 2, single buffered']
    #allocation7 [shape = 'u8[196608]{0}', space=vmem, size = 0x30000, scoped, tag = 'input window, operand 3, single buffered']
    #allocation8 [shape = 's32[1]{0}', space=sflag, size = 0x4, scoped, tag = 'scoped memory for tpu_custom_call.1']
    #allocation9 [shape = 'u8[196608]{0}', space=vmem, size = 0x30000, scoped, tag = 'input window, operand 5, single buffered']
    #allocation10 [shape = 'u8[1536]{0}', space=vmem, size = 0x800, scoped, tag = 'input window, operand 6, single buffered']
    #allocation11 [shape = 's32[1]{0}', space=sflag, size = 0x4, scoped, tag = 'scoped memory for tpu_custom_call.1']
    %14 = vsyncpa [#allocation3], 0
    %15 = vsyncpa [#allocation5], 0
    %16 = vsyncpa [#allocation8], 0
    %17 = vsyncpa [#allocation11], 0
    // Predicated region
    $region2: #{tpu_custom_call.1} parent=1 // pred_check
      _
    $region3: #{tpu_custom_call.1} parent=1 // pred_check_branch
      %19 = sbr.rel (0) target = $region5
    $region4: #{tpu_custom_call.1} parent=1 // pred_region
      %21 = vsyncadd [#allocation3], 0
      %s23 = sshll.u32 %s0, 4
      %s24 = int_to_ptr.hbm [resolvable:$true] %s23
      %s25 = sshll.u32 [#allocation2], 4
      %s26 = int_to_ptr.vmem [resolvable:$true] %s25
      %28 = dma.hbm_to_vmem [thread:$0]  %s24, 128, %s26, [#allocation3]
    $region5: #{tpu_custom_call.1} parent=1 // pred_fallthru
      _
    // Predicated region
    $region6: #{tpu_custom_call.1} parent=1 // pred_check
      _
    $region7: #{tpu_custom_call.1} parent=1 // pred_check_branch
      %30 = sbr.rel (0) target = $region9
    $region8: #{tpu_custom_call.1} parent=1 // pred_region
      %32 = vsyncadd [#allocation5], 0
      %s33 = sshll.u32 %s1, 4
      %s34 = int_to_ptr.hbm [resolvable:$true] %s33
      %s35 = sshll.u32 [#allocation4], 4
      %s36 = int_to_ptr.vmem [resolvable:$true] %s35
      %41 = dma.hbm_to_vmem [thread:$0]  %s34, 512, %s36, [#allocation5], 256, 256, 16
    $region9: #{tpu_custom_call.1} parent=1 // pred_fallthru
      _
    // Predicated region
    $region10: #{tpu_custom_call.1} parent=1 // pred_check
      _
    $region11: #{tpu_custom_call.1} parent=1 // pred_check_branch
      %43 = sbr.rel (0) target = $region13
    $region12: #{tpu_custom_call.1} parent=1 // pred_region
      %45 = vsyncadd [#allocation5], 0
      %s47 = sshll.u32 %s2, 4
      %s48 = int_to_ptr.hbm [resolvable:$true] %s47
      %s49 = sshll.u32 [#allocation6], 4
      %s50 = int_to_ptr.vmem [resolvable:$true] %s49
      %52 = dma.hbm_to_vmem [thread:$0]  %s48, 64, %s50, [#allocation5]
    $region13: #{tpu_custom_call.1} parent=1 // pred_fallthru
      _
    // Predicated region
    $region14: #{tpu_custom_call.1} parent=1 // pred_check
      _
    $region15: #{tpu_custom_call.1} parent=1 // pred_check_branch
      %54 = sbr.rel (0) target = $region17
    $region16: #{tpu_custom_call.1} parent=1 // pred_region
      %56 = vsyncadd [#allocation8], 0
      %s57 = sshll.u32 %s3, 4
      %s58 = int_to_ptr.hbm [resolvable:$true] %s57
      %s59 = sshll.u32 [#allocation7], 4
      %s60 = int_to_ptr.vmem [resolvable:$true] %s59
      %65 = dma.hbm_to_vmem [thread:$0]  %s58, 6144, %s60, [#allocation8], 192, 192, 12
    $region17: #{tpu_custom_call.1} parent=1 // pred_fallthru
      _
    // Predicated region
    $region18: #{tpu_custom_call.1} parent=1 // pred_check
      _
    $region19: #{tpu_custom_call.1} parent=1 // pred_check_branch
      %67 = sbr.rel (0) target = $region21
    $region20: #{tpu_custom_call.1} parent=1 // pred_region
      _
    $region21: #{tpu_custom_call.1} parent=1 // pred_fallthru
      _
    // Predicated region
    $region22: #{tpu_custom_call.1} parent=1 // pred_check
      _
    $region23: #{tpu_custom_call.1} parent=1 // pred_check_branch
      %69 = sbr.rel (0) target = $region25
    $region24: #{tpu_custom_call.1} parent=1 // pred_region
      %71 = vsyncadd [#allocation8], 0
      %s72 = sshll.u32 %s5, 4
      %s73 = int_to_ptr.hbm [resolvable:$true] %s72
      %s74 = sshll.u32 [#allocation9], 4
      %s75 = int_to_ptr.vmem [resolvable:$true] %s74
      %80 = dma.hbm_to_vmem [thread:$0]  %s73, 6144, %s75, [#allocation8], 192, 192, 12
    $region25: #{tpu_custom_call.1} parent=1 // pred_fallthru
      _
    // Predicated region
    $region26: #{tpu_custom_call.1} parent=1 // pred_check
      _
    $region27: #{tpu_custom_call.1} parent=1 // pred_check_branch
      %82 = sbr.rel (0) target = $region29
    $region28: #{tpu_custom_call.1} parent=1 // pred_region
      %84 = vsyncadd [#allocation11], 0
      %s86 = sshll.u32 %s6, 4
      %s87 = int_to_ptr.hbm [resolvable:$true] %s86
      %s88 = sshll.u32 [#allocation10], 4
      %s89 = int_to_ptr.vmem [resolvable:$true] %s88
      %91 = dma.hbm_to_vmem [thread:$0]  %s87, 48, %s89, [#allocation11]
    $region29: #{tpu_custom_call.1} parent=1 // pred_fallthru
      _
    // Predicated region
    $region30: #{tpu_custom_call.1} parent=1 // pred_check
      _
    $region31: #{tpu_custom_call.1} parent=1 // pred_check_branch
      %93 = sbr.rel (0) target = $region33
    $region32: #{tpu_custom_call.1} parent=1 // pred_region
      _
    $region33: #{tpu_custom_call.1} parent=1 // pred_fallthru
      _
    // Predicated region
    $region34: #{tpu_custom_call.1} parent=1 // pred_check
      _
    $region35: #{tpu_custom_call.1} parent=1 // pred_check_branch
      %95 = sbr.rel (0) target = $region37
    $region36: #{tpu_custom_call.1} parent=1 // pred_region
      _
    $region37: #{tpu_custom_call.1} parent=1 // pred_fallthru
      _
    // Predicated region
    $region38: #{tpu_custom_call.1} parent=1 // pred_check
      _
    $region39: #{tpu_custom_call.1} parent=1 // pred_check_branch
      %97 = sbr.rel (0) target = $region41
    $region40: #{tpu_custom_call.1} parent=1 // pred_region
      %99 = dma.done [#allocation3], 128
    $region41: #{tpu_custom_call.1} parent=1 // pred_fallthru
      _
    // Predicated region
    $region42: #{tpu_custom_call.1} parent=1 // pred_check
      _
    $region43: #{tpu_custom_call.1} parent=1 // pred_check_branch
      %101 = sbr.rel (0) target = $region45
    $region44: #{tpu_custom_call.1} parent=1 // pred_region
      %103 = dma.done [#allocation5], 512
    $region45: #{tpu_custom_call.1} parent=1 // pred_fallthru
      _
    // Predicated region
    $region46: #{tpu_custom_call.1} parent=1 // pred_check
      _
    $region47: #{tpu_custom_call.1} parent=1 // pred_check_branch
      %105 = sbr.rel (0) target = $region49
    $region48: #{tpu_custom_call.1} parent=1 // pred_region
      %107 = dma.done [#allocation5], 64
    $region49: #{tpu_custom_call.1} parent=1 // pred_fallthru
      _
    // Predicated region
    $region50: #{tpu_custom_call.1} parent=1 // pred_check
      _
    $region51: #{tpu_custom_call.1} parent=1 // pred_check_branch
      %109 = sbr.rel (0) target = $region53
    $region52: #{tpu_custom_call.1} parent=1 // pred_region
      %111 = dma.done [#allocation8], 6144
    $region53: #{tpu_custom_call.1} parent=1 // pred_fallthru
      _
    // Predicated region
    $region54: #{tpu_custom_call.1} parent=1 // pred_check
      _
    $region55: #{tpu_custom_call.1} parent=1 // pred_check_branch
      %113 = sbr.rel (0) target = $region57
    $region56: #{tpu_custom_call.1} parent=1 // pred_region
      %115 = dma.done [#allocation8], 6144
    $region57: #{tpu_custom_call.1} parent=1 // pred_fallthru
      _
    // Predicated region
    $region58: #{tpu_custom_call.1} parent=1 // pred_check
      _
    $region59: #{tpu_custom_call.1} parent=1 // pred_check_branch
      %117 = sbr.rel (0) target = $region61
    $region60: #{tpu_custom_call.1} parent=1 // pred_region
      %119 = dma.done [#allocation11], 48
    $region61: #{tpu_custom_call.1} parent=1 // pred_fallthru
      _
    %v121 = vld [vmem:[#allocation2] sm:$0xff]
    %v122 = vpack.c.bf16 %v121, %v121
    %v123 = vld [vmem:[#allocation4] sm:$0xff]
    %v124 = vld [vmem:[#allocation4 + $0x8] sm:$0xff]
    %v125 = vld [vmem:[#allocation4 + $0x10] sm:$0xff]
    %v126 = vld [vmem:[#allocation4 + $0x18] sm:$0xff]
    %v127 = vld [vmem:[#allocation6] sm:$0xf]
    %v129 = vperm.slane %v127, 0
    %v130 = vperm.slane %v127, 1
    %v131 = vperm.slane %v127, 2
    %v132 = vperm.slane %v127, 3
    %v141 = vunpack.c.l.b16 %v123
    %v142 = vunpack.c.h.b16 %v123
    %v143 = vunpack.c.l.b16 %v124
    %v144 = vunpack.c.h.b16 %v124
    %v145 = vunpack.c.l.b16 %v125
    %v146 = vunpack.c.h.b16 %v125
    %v147 = vunpack.c.l.b16 %v126
    %v148 = vunpack.c.h.b16 %v126
    %v149 = vpack.c.b16 %v145, %v141
    %v150 = vpack.c.b16 %v146, %v142
    %v151 = vpack.c.b16 %v147, %v143
    %v152 = vpack.c.b16 %v148, %v144
    %vm157 = vcmask 130048
    %v159 = vsel %vm157, %v122, 0
    %161 = vmatpush.bf16.msra.mxu0 0
    %162 = vmatpush.bf16.msra.mxu0 0
    %163 = vmatpush.bf16.msra.mxu0 0
    %164 = vmatpush.bf16.msra.mxu0 0
    %165 = vmatpush.bf16.msra.mxu0 0
    %166 = vmatpush.bf16.msra.mxu0 0
    %167 = vmatpush.bf16.msra.mxu0 0
    %168 = vmatpush.bf16.msra.mxu0 %v149
    %169 = vmatmul.bf16.gmra.mxu0 %v159
    %v170 = vpop.f32.mrf.mxu0
    %v171 = vadd.f32 %v129, %v170
    %v172 = vpop.f32.mrf.mxu0
    %173 = vdwg.mxu0
    %174 = vmatpush.bf16.msra.mxu0 0
    %175 = vmatpush.bf16.msra.mxu0 0
    %176 = vmatpush.bf16.msra.mxu0 0
    %177 = vmatpush.bf16.msra.mxu0 0
    %178 = vmatpush.bf16.msra.mxu0 0
    %179 = vmatpush.bf16.msra.mxu0 0
    %180 = vmatpush.bf16.msra.mxu0 0
    %181 = vmatpush.bf16.msra.mxu0 %v150
    %182 = vmatmul.bf16.gmra.mxu0 %v159
    %v183 = vpop.f32.mrf.mxu0
    %v184 = vadd.f32 %v130, %v183
    %v185 = vpop.f32.mrf.mxu0
    %186 = vdwg.mxu0
    %187 = vmatpush.bf16.msra.mxu0 0
    %188 = vmatpush.bf16.msra.mxu0 0
    %189 = vmatpush.bf16.msra.mxu0 0
    %190 = vmatpush.bf16.msra.mxu0 0
    %191 = vmatpush.bf16.msra.mxu0 0
    %192 = vmatpush.bf16.msra.mxu0 0
    %193 = vmatpush.bf16.msra.mxu0 0
    %194 = vmatpush.bf16.msra.mxu0 %v151
    %195 = vmatmul.bf16.gmra.mxu0 %v159
    %v196 = vpop.f32.mrf.mxu0
    %v197 = vadd.f32 %v131, %v196
    %v198 = vpop.f32.mrf.mxu0
    %199 = vdwg.mxu0
    %200 = vmatpush.bf16.msra.mxu0 0
    %201 = vmatpush.bf16.msra.mxu0 0
    %202 = vmatpush.bf16.msra.mxu0 0
    %203 = vmatpush.bf16.msra.mxu0 0
    %204 = vmatpush.bf16.msra.mxu0 0
    %205 = vmatpush.bf16.msra.mxu0 0
    %206 = vmatpush.bf16.msra.mxu0 0
    %207 = vmatpush.bf16.msra.mxu0 %v152
    %208 = vmatmul.bf16.gmra.mxu0 %v159
    %v209 = vpop.f32.mrf.mxu0
    %v210 = vadd.f32 %v132, %v209
    %v211 = vpop.f32.mrf.mxu0
    %212 = vdwg.mxu0
    %v213 = vmax.f32 %v171, 0.0
    %v214 = vmax.f32 %v184, 0.0
    %v215 = vmax.f32 %v197, 0.0
    %v216 = vmax.f32 %v210, 0.0
    %v217 = vpack.c.bf16 %v214, %v213
    %v218 = vpack.c.bf16 %v216, %v215
    %v219 = vld [vmem:[#allocation7] sm:$0xff]
    %v220 = vld [vmem:[#allocation7 + $0x8] sm:$0xf]
    %v221 = vld [vmem:[#allocation7 + $0xc] sm:$0xff]
    %v222 = vld [vmem:[#allocation7 + $0x14] sm:$0xf]
    %v223 = vld [vmem:[#allocation7 + $0x18] sm:$0xff]
    %v224 = vld [vmem:[#allocation7 + $0x20] sm:$0xf]
    %v225 = vld [vmem:[#allocation7 + $0x24] sm:$0xff]
    %v226 = vld [vmem:[#allocation7 + $0x2c] sm:$0xf]
    %v227 = vld [vmem:[#allocation7 + $0x30] sm:$0xff]
    %v228 = vld [vmem:[#allocation7 + $0x38] sm:$0xf]
    %v229 = vld [vmem:[#allocation7 + $0x3c] sm:$0xff]
    %v230 = vld [vmem:[#allocation7 + $0x44] sm:$0xf]
    %v231 = vld [vmem:[#allocation7 + $0x48] sm:$0xff]
    %v232 = vld [vmem:[#allocation7 + $0x50] sm:$0xf]
    %v233 = vld [vmem:[#allocation7 + $0x54] sm:$0xff]
    %v234 = vld [vmem:[#allocation7 + $0x5c] sm:$0xf]
    %v235 = vld [vmem:[#allocation7 + $0x60] sm:$0xff]
    %v236 = vld [vmem:[#allocation7 + $0x68] sm:$0xf]
    %v237 = vld [vmem:[#allocation7 + $0x6c] sm:$0xff]
    %v238 = vld [vmem:[#allocation7 + $0x74] sm:$0xf]
    %v239 = vld [vmem:[#allocation7 + $0x78] sm:$0xff]
    %v240 = vld [vmem:[#allocation7 + $0x80] sm:$0xf]
    %v241 = vld [vmem:[#allocation7 + $0x84] sm:$0xff]
    %v242 = vld [vmem:[#allocation7 + $0x8c] sm:$0xf]
    %v243 = vld [vmem:[#allocation7 + $0x90] sm:$0xff]
    %v244 = vld [vmem:[#allocation7 + $0x98] sm:$0xf]
    %v245 = vld [vmem:[#allocation7 + $0x9c] sm:$0xff]
    %v246 = vld [vmem:[#allocation7 + $0xa4] sm:$0xf]
    %v247 = vld [vmem:[#allocation7 + $0xa8] sm:$0xff]
    %v248 = vld [vmem:[#allocation7 + $0xb0] sm:$0xf]
    %v249 = vld [vmem:[#allocation7 + $0xb4] sm:$0xff]
    %v250 = vld [vmem:[#allocation7 + $0xbc] sm:$0xf]
    %v251 = vld [vmem:[#allocation7 + $0xc0] sm:$0xff]
    %v252 = vld [vmem:[#allocation7 + $0xc8] sm:$0xf]
    %v253 = vld [vmem:[#allocation7 + $0xcc] sm:$0xff]
    %v254 = vld [vmem:[#allocation7 + $0xd4] sm:$0xf]
    %v255 = vld [vmem:[#allocation7 + $0xd8] sm:$0xff]
    %v256 = vld [vmem:[#allocation7 + $0xe0] sm:$0xf]
    %v257 = vld [vmem:[#allocation7 + $0xe4] sm:$0xff]
    %v258 = vld [vmem:[#allocation7 + $0xec] sm:$0xf]
    %v259 = vld [vmem:[#allocation7 + $0xf0] sm:$0xff]
    %v260 = vld [vmem:[#allocation7 + $0xf8] sm:$0xf]
    %v261 = vld [vmem:[#allocation7 + $0xfc] sm:$0xff]
    %v262 = vld [vmem:[#allocation7 + $0x104] sm:$0xf]
    %v263 = vld [vmem:[#allocation7 + $0x108] sm:$0xff]
    %v264 = vld [vmem:[#allocation7 + $0x110] sm:$0xf]
    %v265 = vld [vmem:[#allocation7 + $0x114] sm:$0xff]
    %v266 = vld [vmem:[#allocation7 + $0x11c] sm:$0xf]
    %v267 = vld [vmem:[#allocation7 + $0x120] sm:$0xff]
    %v268 = vld [vmem:[#allocation7 + $0x128] sm:$0xf]
    %v269 = vld [vmem:[#allocation7 + $0x12c] sm:$0xff]
    %v270 = vld [vmem:[#allocation7 + $0x134] sm:$0xf]
    %v271 = vld [vmem:[#allocation7 + $0x138] sm:$0xff]
    %v272 = vld [vmem:[#allocation7 + $0x140] sm:$0xf]
    %v273 = vld [vmem:[#allocation7 + $0x144] sm:$0xff]
    %v274 = vld [vmem:[#allocation7 + $0x14c] sm:$0xf]
    %v275 = vld [vmem:[#allocation7 + $0x150] sm:$0xff]
    %v276 = vld [vmem:[#allocation7 + $0x158] sm:$0xf]
    %v277 = vld [vmem:[#allocation7 + $0x15c] sm:$0xff]
    %v278 = vld [vmem:[#allocation7 + $0x164] sm:$0xf]
    %v279 = vld [vmem:[#allocation7 + $0x168] sm:$0xff]
    %v280 = vld [vmem:[#allocation7 + $0x170] sm:$0xf]
    %v281 = vld [vmem:[#allocation7 + $0x174] sm:$0xff]
    %v282 = vld [vmem:[#allocation7 + $0x17c] sm:$0xf]
    %v283 = vld [vmem:[%s4] sm:$0x7]
    %v285 = vperm.slane %v283, 0
    %v286 = vperm.slane %v283, 1
    %v287 = vperm.slane %v283, 2
    %v292 = vunpack.c.l.b16 %v217
    %v293 = vunpack.c.h.b16 %v217
    %v294 = vpack.c.b16 %v292, %v292
    %v295 = vpack.c.b16 %v293, %v293
    %v362 = vunpack.c.l.b16 %v219
    %v363 = vunpack.c.h.b16 %v219
    %v364 = vunpack.c.l.b16 %v220
    %v365 = vunpack.c.l.b16 %v221
    %v366 = vunpack.c.h.b16 %v221
    %v367 = vunpack.c.l.b16 %v222
    %v368 = vunpack.c.l.b16 %v223
    %v369 = vunpack.c.h.b16 %v223
    %v370 = vunpack.c.l.b16 %v224
    %v371 = vunpack.c.l.b16 %v225
    %v372 = vunpack.c.h.b16 %v225
    %v373 = vunpack.c.l.b16 %v226
    %v374 = vunpack.c.l.b16 %v227
    %v375 = vunpack.c.h.b16 %v227
    %v376 = vunpack.c.l.b16 %v228
    %v377 = vunpack.c.l.b16 %v229
    %v378 = vunpack.c.h.b16 %v229
    %v379 = vunpack.c.l.b16 %v230
    %v380 = vunpack.c.l.b16 %v231
    %v381 = vunpack.c.h.b16 %v231
    %v382 = vunpack.c.l.b16 %v232
    %v383 = vunpack.c.l.b16 %v233
    %v384 = vunpack.c.h.b16 %v233
    %v385 = vunpack.c.l.b16 %v234
    %v386 = vunpack.c.l.b16 %v235
    %v387 = vunpack.c.h.b16 %v235
    %v388 = vunpack.c.l.b16 %v236
    %v389 = vunpack.c.l.b16 %v237
    %v390 = vunpack.c.h.b16 %v237
    %v391 = vunpack.c.l.b16 %v238
    %v392 = vunpack.c.l.b16 %v239
    %v393 = vunpack.c.h.b16 %v239
    %v394 = vunpack.c.l.b16 %v240
    %v395 = vunpack.c.l.b16 %v241
    %v396 = vunpack.c.h.b16 %v241
    %v397 = vunpack.c.l.b16 %v242
    %v398 = vunpack.c.l.b16 %v243
    %v399 = vunpack.c.h.b16 %v243
    %v400 = vunpack.c.l.b16 %v244
    %v401 = vunpack.c.l.b16 %v245
    %v402 = vunpack.c.h.b16 %v245
    %v403 = vunpack.c.l.b16 %v246
    %v404 = vunpack.c.l.b16 %v247
    %v405 = vunpack.c.h.b16 %v247
    %v406 = vunpack.c.l.b16 %v248
    %v407 = vunpack.c.l.b16 %v249
    %v408 = vunpack.c.h.b16 %v249
    %v409 = vunpack.c.l.b16 %v250
    %v410 = vunpack.c.l.b16 %v251
    %v411 = vunpack.c.h.b16 %v251
    %v412 = vunpack.c.l.b16 %v252
    %v413 = vunpack.c.l.b16 %v253
    %v414 = vunpack.c.h.b16 %v253
    %v415 = vunpack.c.l.b16 %v254
    %v416 = vunpack.c.l.b16 %v255
    %v417 = vunpack.c.h.b16 %v255
    %v418 = vunpack.c.l.b16 %v256
    %v419 = vunpack.c.l.b16 %v257
    %v420 = vunpack.c.h.b16 %v257
    %v421 = vunpack.c.l.b16 %v258
    %v422 = vunpack.c.l.b16 %v259
    %v423 = vunpack.c.h.b16 %v259
    %v424 = vunpack.c.l.b16 %v260
    %v425 = vunpack.c.l.b16 %v261
    %v426 = vunpack.c.h.b16 %v261
    %v427 = vunpack.c.l.b16 %v262
    %v428 = vunpack.c.l.b16 %v263
    %v429 = vunpack.c.h.b16 %v263
    %v430 = vunpack.c.l.b16 %v264
    %v431 = vunpack.c.l.b16 %v265
    %v432 = vunpack.c.h.b16 %v265
    %v433 = vunpack.c.l.b16 %v266
    %v434 = vunpack.c.l.b16 %v267
    %v435 = vunpack.c.h.b16 %v267
    %v436 = vunpack.c.l.b16 %v268
    %v437 = vunpack.c.l.b16 %v269
    %v438 = vunpack.c.h.b16 %v269
    %v439 = vunpack.c.l.b16 %v270
    %v440 = vunpack.c.l.b16 %v271
    %v441 = vunpack.c.h.b16 %v271
    %v442 = vunpack.c.l.b16 %v272
    %v443 = vunpack.c.l.b16 %v273
    %v444 = vunpack.c.h.b16 %v273
    %v445 = vunpack.c.l.b16 %v274
    %v446 = vunpack.c.l.b16 %v275
    %v447 = vunpack.c.h.b16 %v275
    %v448 = vunpack.c.l.b16 %v276
    %v449 = vunpack.c.l.b16 %v277
    %v450 = vunpack.c.h.b16 %v277
    %v451 = vunpack.c.l.b16 %v278
    %v452 = vunpack.c.l.b16 %v279
    %v453 = vunpack.c.h.b16 %v279
    %v454 = vunpack.c.l.b16 %v280
    %v455 = vunpack.c.l.b16 %v281
    %v456 = vunpack.c.h.b16 %v281
    %v457 = vunpack.c.l.b16 %v282
    %v458 = vpack.c.b16 %v365, %v362
    %v459 = vpack.c.b16 %v366, %v363
    %v460 = vpack.c.b16 %v367, %v364
    %v461 = vpack.c.b16 %v371, %v368
    %v462 = vpack.c.b16 %v372, %v369
    %v463 = vpack.c.b16 %v373, %v370
    %v464 = vpack.c.b16 %v377, %v374
    %v465 = vpack.c.b16 %v378, %v375
    %v466 = vpack.c.b16 %v379, %v376
    %v467 = vpack.c.b16 %v383, %v380
    %v468 = vpack.c.b16 %v384, %v381
    %v469 = vpack.c.b16 %v385, %v382
    %v470 = vpack.c.b16 %v389, %v386
    %v471 = vpack.c.b16 %v390, %v387
    %v472 = vpack.c.b16 %v391, %v388
    %v473 = vpack.c.b16 %v395, %v392
    %v474 = vpack.c.b16 %v396, %v393
    %v475 = vpack.c.b16 %v397, %v394
    %v476 = vpack.c.b16 %v401, %v398
    %v477 = vpack.c.b16 %v402, %v399
    %v478 = vpack.c.b16 %v403, %v400
    %v479 = vpack.c.b16 %v407, %v404
    %v480 = vpack.c.b16 %v408, %v405
    %v481 = vpack.c.b16 %v409, %v406
    %v482 = vpack.c.b16 %v413, %v410
    %v483 = vpack.c.b16 %v414, %v411
    %v484 = vpack.c.b16 %v415, %v412
    %v485 = vpack.c.b16 %v419, %v416
    %v486 = vpack.c.b16 %v420, %v417
    %v487 = vpack.c.b16 %v421, %v418
    %v488 = vpack.c.b16 %v425, %v422
    %v489 = vpack.c.b16 %v426, %v423
    %v490 = vpack.c.b16 %v427, %v424
    %v491 = vpack.c.b16 %v431, %v428
    %v492 = vpack.c.b16 %v432, %v429
    %v493 = vpack.c.b16 %v433, %v430
    %v494 = vpack.c.b16 %v437, %v434
    %v495 = vpack.c.b16 %v438, %v435
    %v496 = vpack.c.b16 %v439, %v436
    %v497 = vpack.c.b16 %v443, %v440
    %v498 = vpack.c.b16 %v444, %v441
    %v499 = vpack.c.b16 %v445, %v442
    %v500 = vpack.c.b16 %v449, %v446
    %v501 = vpack.c.b16 %v450, %v447
    %v502 = vpack.c.b16 %v451, %v448
    %v503 = vpack.c.b16 %v455, %v452
    %v504 = vpack.c.b16 %v456, %v453
    %v505 = vpack.c.b16 %v457, %v454
    %554 = vmatpush.bf16.msra.mxu0 %v479
    %555 = vmatpush.bf16.msra.mxu0 %v476
    %556 = vmatpush.bf16.msra.mxu0 %v473
    %557 = vmatpush.bf16.msra.mxu0 %v470
    %558 = vmatpush.bf16.msra.mxu0 %v467
    %559 = vmatpush.bf16.msra.mxu0 %v464
    %560 = vmatpush.bf16.msra.mxu0 %v461
    %561 = vmatpush.bf16.msra.mxu0 %v458
    %562 = vmatmul.bf16.gmra.mxu0 %v294
    %v563 = vpop.f32.mrf.mxu0
    %v564 = vadd.f32 %v285, %v563
    %v565 = vpop.f32.mrf.mxu0
    %566 = vdwg.mxu0
    %567 = vmatpush.bf16.msra.mxu0 %v503
    %568 = vmatpush.bf16.msra.mxu0 %v500
    %569 = vmatpush.bf16.msra.mxu0 %v497
    %570 = vmatpush.bf16.msra.mxu0 %v494
    %571 = vmatpush.bf16.msra.mxu0 %v491
    %572 = vmatpush.bf16.msra.mxu0 %v488
    %573 = vmatpush.bf16.msra.mxu0 %v485
    %574 = vmatpush.bf16.msra.mxu0 %v482
    %575 = vmatmul.bf16.gmra.mxu0 %v295
    %v576 = vpop.f32.mrf.mxu0
    %v577 = vadd.f32 %v564, %v576
    %v578 = vpop.f32.mrf.mxu0
    %579 = vdwg.mxu0
    %580 = vmatpush.bf16.msra.mxu0 %v480
    %581 = vmatpush.bf16.msra.mxu0 %v477
    %582 = vmatpush.bf16.msra.mxu0 %v474
    %583 = vmatpush.bf16.msra.mxu0 %v471
    %584 = vmatpush.bf16.msra.mxu0 %v468
    %585 = vmatpush.bf16.msra.mxu0 %v465
    %586 = vmatpush.bf16.msra.mxu0 %v462
    %587 = vmatpush.bf16.msra.mxu0 %v459
    %588 = vmatmul.bf16.gmra.mxu0 %v294
    %v589 = vpop.f32.mrf.mxu0
    %v590 = vadd.f32 %v286, %v589
    %v591 = vpop.f32.mrf.mxu0
    %592 = vdwg.mxu0
    %593 = vmatpush.bf16.msra.mxu0 %v504
    %594 = vmatpush.bf16.msra.mxu0 %v501
    %595 = vmatpush.bf16.msra.mxu0 %v498
    %596 = vmatpush.bf16.msra.mxu0 %v495
    %597 = vmatpush.bf16.msra.mxu0 %v492
    %598 = vmatpush.bf16.msra.mxu0 %v489
    %599 = vmatpush.bf16.msra.mxu0 %v486
    %600 = vmatpush.bf16.msra.mxu0 %v483
    %601 = vmatmul.bf16.gmra.mxu0 %v295
    %v602 = vpop.f32.mrf.mxu0
    %v603 = vadd.f32 %v590, %v602
    %v604 = vpop.f32.mrf.mxu0
    %605 = vdwg.mxu0
    %606 = vmatpush.bf16.msra.mxu0 %v481
    %607 = vmatpush.bf16.msra.mxu0 %v478
    %608 = vmatpush.bf16.msra.mxu0 %v475
    %609 = vmatpush.bf16.msra.mxu0 %v472
    %610 = vmatpush.bf16.msra.mxu0 %v469
    %611 = vmatpush.bf16.msra.mxu0 %v466
    %612 = vmatpush.bf16.msra.mxu0 %v463
    %613 = vmatpush.bf16.msra.mxu0 %v460
    %614 = vmatmul.bf16.gmra.mxu0 %v294
    %v615 = vpop.f32.mrf.mxu0
    %v616 = vadd.f32 %v287, %v615
    %v617 = vpop.f32.mrf.mxu0
    %618 = vdwg.mxu0
    %619 = vmatpush.bf16.msra.mxu0 %v505
    %620 = vmatpush.bf16.msra.mxu0 %v502
    %621 = vmatpush.bf16.msra.mxu0 %v499
    %622 = vmatpush.bf16.msra.mxu0 %v496
    %623 = vmatpush.bf16.msra.mxu0 %v493
    %624 = vmatpush.bf16.msra.mxu0 %v490
    %625 = vmatpush.bf16.msra.mxu0 %v487
    %626 = vmatpush.bf16.msra.mxu0 %v484
    %627 = vmatmul.bf16.gmra.mxu0 %v295
    %v628 = vpop.f32.mrf.mxu0
    %v629 = vadd.f32 %v616, %v628
    %v630 = vpop.f32.mrf.mxu0
    %631 = vdwg.mxu0
    %v632 = vmax.f32 %v577, 0.0
    %v633 = vmax.f32 %v603, 0.0
    %v634 = vmax.f32 %v629, 0.0
    %v635 = vld [vmem:[#allocation9] sm:$0xff]
    %v636 = vld [vmem:[#allocation9 + $0x8] sm:$0xf]
    %v637 = vld [vmem:[#allocation9 + $0xc] sm:$0xff]
    %v638 = vld [vmem:[#allocation9 + $0x14] sm:$0xf]
    %v639 = vld [vmem:[#allocation9 + $0x18] sm:$0xff]
    %v640 = vld [vmem:[#allocation9 + $0x20] sm:$0xf]
    %v641 = vld [vmem:[#allocation9 + $0x24] sm:$0xff]
    %v642 = vld [vmem:[#allocation9 + $0x2c] sm:$0xf]
    %v643 = vld [vmem:[#allocation9 + $0x30] sm:$0xff]
    %v644 = vld [vmem:[#allocation9 + $0x38] sm:$0xf]
    %v645 = vld [vmem:[#allocation9 + $0x3c] sm:$0xff]
    %v646 = vld [vmem:[#allocation9 + $0x44] sm:$0xf]
    %v647 = vld [vmem:[#allocation9 + $0x48] sm:$0xff]
    %v648 = vld [vmem:[#allocation9 + $0x50] sm:$0xf]
    %v649 = vld [vmem:[#allocation9 + $0x54] sm:$0xff]
    %v650 = vld [vmem:[#allocation9 + $0x5c] sm:$0xf]
    %v651 = vld [vmem:[#allocation9 + $0x60] sm:$0xff]
    %v652 = vld [vmem:[#allocation9 + $0x68] sm:$0xf]
    %v653 = vld [vmem:[#allocation9 + $0x6c] sm:$0xff]
    %v654 = vld [vmem:[#allocation9 + $0x74] sm:$0xf]
    %v655 = vld [vmem:[#allocation9 + $0x78] sm:$0xff]
    %v656 = vld [vmem:[#allocation9 + $0x80] sm:$0xf]
    %v657 = vld [vmem:[#allocation9 + $0x84] sm:$0xff]
    %v658 = vld [vmem:[#allocation9 + $0x8c] sm:$0xf]
    %v659 = vld [vmem:[#allocation9 + $0x90] sm:$0xff]
    %v660 = vld [vmem:[#allocation9 + $0x98] sm:$0xf]
    %v661 = vld [vmem:[#allocation9 + $0x9c] sm:$0xff]
    %v662 = vld [vmem:[#allocation9 + $0xa4] sm:$0xf]
    %v663 = vld [vmem:[#allocation9 + $0xa8] sm:$0xff]
    %v664 = vld [vmem:[#allocation9 + $0xb0] sm:$0xf]
    %v665 = vld [vmem:[#allocation9 + $0xb4] sm:$0xff]
    %v666 = vld [vmem:[#allocation9 + $0xbc] sm:$0xf]
    %v667 = vld [vmem:[#allocation9 + $0xc0] sm:$0xff]
    %v668 = vld [vmem:[#allocation9 + $0xc8] sm:$0xf]
    %v669 = vld [vmem:[#allocation9 + $0xcc] sm:$0xff]
    %v670 = vld [vmem:[#allocation9 + $0xd4] sm:$0xf]
    %v671 = vld [vmem:[#allocation9 + $0xd8] sm:$0xff]
    %v672 = vld [vmem:[#allocation9 + $0xe0] sm:$0xf]
    %v673 = vld [vmem:[#allocation9 + $0xe4] sm:$0xff]
    %v674 = vld [vmem:[#allocation9 + $0xec] sm:$0xf]
    %v675 = vld [vmem:[#allocation9 + $0xf0] sm:$0xff]
    %v676 = vld [vmem:[#allocation9 + $0xf8] sm:$0xf]
    %v677 = vld [vmem:[#allocation9 + $0xfc] sm:$0xff]
    %v678 = vld [vmem:[#allocation9 + $0x104] sm:$0xf]
    %v679 = vld [vmem:[#allocation9 + $0x108] sm:$0xff]
    %v680 = vld [vmem:[#allocation9 + $0x110] sm:$0xf]
    %v681 = vld [vmem:[#allocation9 + $0x114] sm:$0xff]
    %v682 = vld [vmem:[#allocation9 + $0x11c] sm:$0xf]
    %v683 = vld [vmem:[#allocation9 + $0x120] sm:$0xff]
    %v684 = vld [vmem:[#allocation9 + $0x128] sm:$0xf]
    %v685 = vld [vmem:[#allocation9 + $0x12c] sm:$0xff]
    %v686 = vld [vmem:[#allocation9 + $0x134] sm:$0xf]
    %v687 = vld [vmem:[#allocation9 + $0x138] sm:$0xff]
    %v688 = vld [vmem:[#allocation9 + $0x140] sm:$0xf]
    %v689 = vld [vmem:[#allocation9 + $0x144] sm:$0xff]
    %v690 = vld [vmem:[#allocation9 + $0x14c] sm:$0xf]
    %v691 = vld [vmem:[#allocation9 + $0x150] sm:$0xff]
    %v692 = vld [vmem:[#allocation9 + $0x158] sm:$0xf]
    %v693 = vld [vmem:[#allocation9 + $0x15c] sm:$0xff]
    %v694 = vld [vmem:[#allocation9 + $0x164] sm:$0xf]
    %v695 = vld [vmem:[#allocation9 + $0x168] sm:$0xff]
    %v696 = vld [vmem:[#allocation9 + $0x170] sm:$0xf]
    %v697 = vld [vmem:[#allocation9 + $0x174] sm:$0xff]
    %v698 = vld [vmem:[#allocation9 + $0x17c] sm:$0xf]
    %v699 = vld [vmem:[#allocation10] sm:$0x7]
    %v701 = vperm.slane %v699, 0
    %v702 = vperm.slane %v699, 1
    %v703 = vperm.slane %v699, 2
    %v708 = vunpack.c.l.b16 %v218
    %v709 = vunpack.c.h.b16 %v218
    %v710 = vpack.c.b16 %v708, %v708
    %v711 = vpack.c.b16 %v709, %v709
    %v778 = vunpack.c.l.b16 %v635
    %v779 = vunpack.c.h.b16 %v635
    %v780 = vunpack.c.l.b16 %v636
    %v781 = vunpack.c.l.b16 %v637
    %v782 = vunpack.c.h.b16 %v637
    %v783 = vunpack.c.l.b16 %v638
    %v784 = vunpack.c.l.b16 %v639
    %v785 = vunpack.c.h.b16 %v639
    %v786 = vunpack.c.l.b16 %v640
    %v787 = vunpack.c.l.b16 %v641
    %v788 = vunpack.c.h.b16 %v641
    %v789 = vunpack.c.l.b16 %v642
    %v790 = vunpack.c.l.b16 %v643
    %v791 = vunpack.c.h.b16 %v643
    %v792 = vunpack.c.l.b16 %v644
    %v793 = vunpack.c.l.b16 %v645
    %v794 = vunpack.c.h.b16 %v645
    %v795 = vunpack.c.l.b16 %v646
    %v796 = vunpack.c.l.b16 %v647
    %v797 = vunpack.c.h.b16 %v647
    %v798 = vunpack.c.l.b16 %v648
    %v799 = vunpack.c.l.b16 %v649
    %v800 = vunpack.c.h.b16 %v649
    %v801 = vunpack.c.l.b16 %v650
    %v802 = vunpack.c.l.b16 %v651
    %v803 = vunpack.c.h.b16 %v651
    %v804 = vunpack.c.l.b16 %v652
    %v805 = vunpack.c.l.b16 %v653
    %v806 = vunpack.c.h.b16 %v653
    %v807 = vunpack.c.l.b16 %v654
    %v808 = vunpack.c.l.b16 %v655
    %v809 = vunpack.c.h.b16 %v655
    %v810 = vunpack.c.l.b16 %v656
    %v811 = vunpack.c.l.b16 %v657
    %v812 = vunpack.c.h.b16 %v657
    %v813 = vunpack.c.l.b16 %v658
    %v814 = vunpack.c.l.b16 %v659
    %v815 = vunpack.c.h.b16 %v659
    %v816 = vunpack.c.l.b16 %v660
    %v817 = vunpack.c.l.b16 %v661
    %v818 = vunpack.c.h.b16 %v661
    %v819 = vunpack.c.l.b16 %v662
    %v820 = vunpack.c.l.b16 %v663
    %v821 = vunpack.c.h.b16 %v663
    %v822 = vunpack.c.l.b16 %v664
    %v823 = vunpack.c.l.b16 %v665
    %v824 = vunpack.c.h.b16 %v665
    %v825 = vunpack.c.l.b16 %v666
    %v826 = vunpack.c.l.b16 %v667
    %v827 = vunpack.c.h.b16 %v667
    %v828 = vunpack.c.l.b16 %v668
    %v829 = vunpack.c.l.b16 %v669
    %v830 = vunpack.c.h.b16 %v669
    %v831 = vunpack.c.l.b16 %v670
    %v832 = vunpack.c.l.b16 %v671
    %v833 = vunpack.c.h.b16 %v671
    %v834 = vunpack.c.l.b16 %v672
    %v835 = vunpack.c.l.b16 %v673
    %v836 = vunpack.c.h.b16 %v673
    %v837 = vunpack.c.l.b16 %v674
    %v838 = vunpack.c.l.b16 %v675
    %v839 = vunpack.c.h.b16 %v675
    %v840 = vunpack.c.l.b16 %v676
    %v841 = vunpack.c.l.b16 %v677
    %v842 = vunpack.c.h.b16 %v677
    %v843 = vunpack.c.l.b16 %v678
    %v844 = vunpack.c.l.b16 %v679
    %v845 = vunpack.c.h.b16 %v679
    %v846 = vunpack.c.l.b16 %v680
    %v847 = vunpack.c.l.b16 %v681
    %v848 = vunpack.c.h.b16 %v681
    %v849 = vunpack.c.l.b16 %v682
    %v850 = vunpack.c.l.b16 %v683
    %v851 = vunpack.c.h.b16 %v683
    %v852 = vunpack.c.l.b16 %v684
    %v853 = vunpack.c.l.b16 %v685
    %v854 = vunpack.c.h.b16 %v685
    %v855 = vunpack.c.l.b16 %v686
    %v856 = vunpack.c.l.b16 %v687
    %v857 = vunpack.c.h.b16 %v687
    %v858 = vunpack.c.l.b16 %v688
    %v859 = vunpack.c.l.b16 %v689
    %v860 = vunpack.c.h.b16 %v689
    %v861 = vunpack.c.l.b16 %v690
    %v862 = vunpack.c.l.b16 %v691
    %v863 = vunpack.c.h.b16 %v691
    %v864 = vunpack.c.l.b16 %v692
    %v865 = vunpack.c.l.b16 %v693
    %v866 = vunpack.c.h.b16 %v693
    %v867 = vunpack.c.l.b16 %v694
    %v868 = vunpack.c.l.b16 %v695
    %v869 = vunpack.c.h.b16 %v695
    %v870 = vunpack.c.l.b16 %v696
    %v871 = vunpack.c.l.b16 %v697
    %v872 = vunpack.c.h.b16 %v697
    %v873 = vunpack.c.l.b16 %v698
    %v874 = vpack.c.b16 %v781, %v778
    %v875 = vpack.c.b16 %v782, %v779
    %v876 = vpack.c.b16 %v783, %v780
    %v877 = vpack.c.b16 %v787, %v784
    %v878 = vpack.c.b16 %v788, %v785
    %v879 = vpack.c.b16 %v789, %v786
    %v880 = vpack.c.b16 %v793, %v790
    %v881 = vpack.c.b16 %v794, %v791
    %v882 = vpack.c.b16 %v795, %v792
    %v883 = vpack.c.b16 %v799, %v796
    %v884 = vpack.c.b16 %v800, %v797
    %v885 = vpack.c.b16 %v801, %v798
    %v886 = vpack.c.b16 %v805, %v802
    %v887 = vpack.c.b16 %v806, %v803
    %v888 = vpack.c.b16 %v807, %v804
    %v889 = vpack.c.b16 %v811, %v808
    %v890 = vpack.c.b16 %v812, %v809
    %v891 = vpack.c.b16 %v813, %v810
    %v892 = vpack.c.b16 %v817, %v814
    %v893 = vpack.c.b16 %v818, %v815
    %v894 = vpack.c.b16 %v819, %v816
    %v895 = vpack.c.b16 %v823, %v820
    %v896 = vpack.c.b16 %v824, %v821
    %v897 = vpack.c.b16 %v825, %v822
    %v898 = vpack.c.b16 %v829, %v826
    %v899 = vpack.c.b16 %v830, %v827
    %v900 = vpack.c.b16 %v831, %v828
    %v901 = vpack.c.b16 %v835, %v832
    %v902 = vpack.c.b16 %v836, %v833
    %v903 = vpack.c.b16 %v837, %v834
    %v904 = vpack.c.b16 %v841, %v838
    %v905 = vpack.c.b16 %v842, %v839
    %v906 = vpack.c.b16 %v843, %v840
    %v907 = vpack.c.b16 %v847, %v844
    %v908 = vpack.c.b16 %v848, %v845
    %v909 = vpack.c.b16 %v849, %v846
    %v910 = vpack.c.b16 %v853, %v850
    %v911 = vpack.c.b16 %v854, %v851
    %v912 = vpack.c.b16 %v855, %v852
    %v913 = vpack.c.b16 %v859, %v856
    %v914 = vpack.c.b16 %v860, %v857
    %v915 = vpack.c.b16 %v861, %v858
    %v916 = vpack.c.b16 %v865, %v862
    %v917 = vpack.c.b16 %v866, %v863
    %v918 = vpack.c.b16 %v867, %v864
    %v919 = vpack.c.b16 %v871, %v868
    %v920 = vpack.c.b16 %v872, %v869
    %v921 = vpack.c.b16 %v873, %v870
    %970 = vmatpush.bf16.msra.mxu0 %v895
    %971 = vmatpush.bf16.msra.mxu0 %v892
    %972 = vmatpush.bf16.msra.mxu0 %v889
    %973 = vmatpush.bf16.msra.mxu0 %v886
    %974 = vmatpush.bf16.msra.mxu0 %v883
    %975 = vmatpush.bf16.msra.mxu0 %v880
    %976 = vmatpush.bf16.msra.mxu0 %v877
    %977 = vmatpush.bf16.msra.mxu0 %v874
    %978 = vmatmul.bf16.gmra.mxu0 %v710
    %v979 = vpop.f32.mrf.mxu0
    %v980 = vadd.f32 %v701, %v979
    %v981 = vpop.f32.mrf.mxu0
    %982 = vdwg.mxu0
    %983 = vmatpush.bf16.msra.mxu0 %v919
    %984 = vmatpush.bf16.msra.mxu0 %v916
    %985 = vmatpush.bf16.msra.mxu0 %v913
    %986 = vmatpush.bf16.msra.mxu0 %v910
    %987 = vmatpush.bf16.msra.mxu0 %v907
    %988 = vmatpush.bf16.msra.mxu0 %v904
    %989 = vmatpush.bf16.msra.mxu0 %v901
    %990 = vmatpush.bf16.msra.mxu0 %v898
    %991 = vmatmul.bf16.gmra.mxu0 %v711
    %v992 = vpop.f32.mrf.mxu0
    %v993 = vadd.f32 %v980, %v992
    %v994 = vpop.f32.mrf.mxu0
    %995 = vdwg.mxu0
    %996 = vmatpush.bf16.msra.mxu0 %v896
    %997 = vmatpush.bf16.msra.mxu0 %v893
    %998 = vmatpush.bf16.msra.mxu0 %v890
    %999 = vmatpush.bf16.msra.mxu0 %v887
    %1000 = vmatpush.bf16.msra.mxu0 %v884
    %1001 = vmatpush.bf16.msra.mxu0 %v881
    %1002 = vmatpush.bf16.msra.mxu0 %v878
    %1003 = vmatpush.bf16.msra.mxu0 %v875
    %1004 = vmatmul.bf16.gmra.mxu0 %v710
    %v1005 = vpop.f32.mrf.mxu0
    %v1006 = vadd.f32 %v702, %v1005
    %v1007 = vpop.f32.mrf.mxu0
    %1008 = vdwg.mxu0
    %1009 = vmatpush.bf16.msra.mxu0 %v920
    %1010 = vmatpush.bf16.msra.mxu0 %v917
    %1011 = vmatpush.bf16.msra.mxu0 %v914
    %1012 = vmatpush.bf16.msra.mxu0 %v911
    %1013 = vmatpush.bf16.msra.mxu0 %v908
    %1014 = vmatpush.bf16.msra.mxu0 %v905
    %1015 = vmatpush.bf16.msra.mxu0 %v902
    %1016 = vmatpush.bf16.msra.mxu0 %v899
    %1017 = vmatmul.bf16.gmra.mxu0 %v711
    %v1018 = vpop.f32.mrf.mxu0
    %v1019 = vadd.f32 %v1006, %v1018
    %v1020 = vpop.f32.mrf.mxu0
    %1021 = vdwg.mxu0
    %1022 = vmatpush.bf16.msra.mxu0 %v897
    %1023 = vmatpush.bf16.msra.mxu0 %v894
    %1024 = vmatpush.bf16.msra.mxu0 %v891
    %1025 = vmatpush.bf16.msra.mxu0 %v888
    %1026 = vmatpush.bf16.msra.mxu0 %v885
    %1027 = vmatpush.bf16.msra.mxu0 %v882
    %1028 = vmatpush.bf16.msra.mxu0 %v879
    %1029 = vmatpush.bf16.msra.mxu0 %v876
    %1030 = vmatmul.bf16.gmra.mxu0 %v710
    %v1031 = vpop.f32.mrf.mxu0
    %v1032 = vadd.f32 %v703, %v1031
    %v1033 = vpop.f32.mrf.mxu0
    %1034 = vdwg.mxu0
    %1035 = vmatpush.bf16.msra.mxu0 %v921
    %1036 = vmatpush.bf16.msra.mxu0 %v918
    %1037 = vmatpush.bf16.msra.mxu0 %v915
    %1038 = vmatpush.bf16.msra.mxu0 %v912
    %1039 = vmatpush.bf16.msra.mxu0 %v909
    %1040 = vmatpush.bf16.msra.mxu0 %v906
    %1041 = vmatpush.bf16.msra.mxu0 %v903
    %1042 = vmatpush.bf16.msra.mxu0 %v900
    %1043 = vmatmul.bf16.gmra.mxu0 %v711
    %v1044 = vpop.f32.mrf.mxu0
    %v1045 = vadd.f32 %v1032, %v1044
    %v1046 = vpop.f32.mrf.mxu0
    %1047 = vdwg.mxu0
    %v1048 = vmax.f32 %v993, 0.0
    %v1049 = vmax.f32 %v1019, 0.0
    %v1050 = vmax.f32 %v1045, 0.0
    %v1051 = vld [vmem:[%s7] sm:$0x7]
    %v1052 = vunpack.c.l.bf16 %v1051
    %v1054 = vperm.slane %v1052, 0
    %v1055 = vperm.slane %v1052, 2
    %v1056 = vperm.slane %v1052, 4
    %v1060 = vperm.slane %v1054, 0
    %v1061 = vperm.slane %v1055, 0
    %v1062 = vperm.slane %v1056, 0
    %v1063 = vmul.f32 %v632, %v1060
    %v1064 = vmul.f32 %v633, %v1061
    %v1065 = vmul.f32 %v634, %v1062
    %v1066 = vadd.f32 %v1063, %v1064
    %v1067 = vadd.f32 %v1066, %v1065
    %1068 = vadd.xlane.f32.xlu0 %v1067
    %v1069 = vpop.xlane.xlu0 %1068
    %v1070 = vperm.slane %v1052, 1
    %v1071 = vperm.slane %v1052, 3
    %v1072 = vperm.slane %v1052, 5
    %v1076 = vperm.slane %v1070, 1
    %v1077 = vperm.slane %v1071, 1
    %v1078 = vperm.slane %v1072, 1
    %v1079 = vmul.f32 %v1048, %v1076
    %v1080 = vmul.f32 %v1049, %v1077
    %v1081 = vmul.f32 %v1050, %v1078
    %v1082 = vadd.f32 %v1079, %v1080
    %v1083 = vadd.f32 %v1082, %v1081
    %1084 = vadd.xlane.f32.xlu0 %v1083
    %v1085 = vpop.xlane.xlu0 %1084
    %vm1086 = vcmask 7168
    %v1087 = vsel %vm1086, %v1069, %v1085
    %v1088 = vld [vmem:[%s8] sm:$0x1]
    %v1090 = vperm.slane %v1088, 0
    %v1092 = vadd.f32 %v1087, %v1090
    %vm1093 = vcmask 15360
    %1094 = vst.msk [vmem:[%s9] sm:$0xff] %vm1093, %v1092
    // Predicated region
    $region62: #{tpu_custom_call.1} parent=1 // pred_check
      _
    $region63: #{tpu_custom_call.1} parent=1 // pred_check_branch
      %1096 = sbr.rel (0) target = $region65
    $region64: #{tpu_custom_call.1} parent=1 // pred_region
      _
    $region65: #{tpu_custom_call.1} parent=1 // pred_fallthru
      _
    // Predicated region
    $region66: #{tpu_custom_call.1} parent=1 // pred_check
      _
    $region67: #{tpu_custom_call.1} parent=1 // pred_check_branch
      %1098 = sbr.rel (0) target = $region69
    $region68: #{tpu_custom_call.1} parent=1 // pred_region
      _
    $region69: #{tpu_custom_call.1} parent=1 // pred_fallthru
      _
    %1099 = vsyncpa [#allocation3], 1
    %1100 = vsyncpa [#allocation5], 1
    %1101 = vsyncpa [#allocation8], 1
    %1102 = vsyncpa [#allocation11], 1

</llo_original>
